<compile_context>
chip_gen: v7x
topology: tpu7x:2x2x1
jax: 0.10.0
libtpu: 0.0.40
codegen_flags: <defaults>
</compile_context>

<pallas_src>
import jax
import jax.numpy as jnp
import numpy as np
from jax.experimental import pallas as pl
from jax.experimental.pallas import tpu as pltpu


def _round_up(x, m):
    return ((x + m - 1) // m) * m


def _vmem_limit_bytes():
    """Per-generation scoped-VMEM budget (~3/4 of physical, capped at 96 MiB)."""
    try:
        phys = int(pltpu.get_tpu_info().vmem_capacity_bytes)
    except Exception:
        phys = 64 * 1024 * 1024          # conservative default (v7x: 64 MiB / TC)
    return int(min(phys * 3 // 4, 96 * 1024 * 1024))


def _choose_b_tile(batch, three_h, seq_len, in_dsize, vmem_limit,
                   target_step_bytes=4 * 1024 * 1024):
    """Batch rows per grid step.

    Sized so each step streams a multi-MiB m block (amortizes the ~0.35 us
    per-step overhead, approaches the HBM roofline) while the double-buffered
    pipeline (m + mask + out blocks + f32 softmax temporaries) fits the
    per-generation VMEM budget.  Always a multiple of 8 so the (b_tile, L)
    mask block and (b_tile, 2, L) output block have dense sublanes.
    """
    m_row = three_h * seq_len * in_dsize                      # m bytes per batch row
    row_vmem = (2 * m_row                                     # double-buffered m
                + 2 * seq_len * 4                             # double-buffered mask
                + 2 * 2 * seq_len * 4                         # double-buffered out
                + 6 * 2 * seq_len * 4)                        # f32 softmax temps
    bt_target = max(1, target_step_bytes // m_row)
    bt_vmem = max(1, (vmem_limit * 7 // 10) // row_vmem)
    bt = max(8, (min(bt_target, bt_vmem) // 8) * 8)
    return min(bt, _round_up(max(batch, 1), 8))


def _bidaf_output_kernel(m_ref, mask_ref, w_ref, out_ref):
    # m_ref    : (Bt, 3H, L) compute dtype -- 3H on sublanes, L lane-dense
    # mask_ref : (Bt, L)     float32 0/1
    # w_ref    : (2, 3H)     compute dtype (row 0 -> logits_1, row 1 -> logits_2)
    # out_ref  : (Bt, 2, L)  float32   (row 0 = log_p1, row 1 = log_p2)
    bt = m_ref.shape[0]
    w = w_ref[...]
    # Batched MXU contraction over 3H.  Both operands are already in the MXU's
    # natural layout (K on LHS lanes / RHS sublanes, N = L lane-dense), so no
    # relayout / vxpose is needed.  f32 accumulation regardless of input dtype.
    wb = jnp.broadcast_to(w[None], (bt,) + w.shape)               # (Bt, 2, 3H)
    logits = jnp.einsum('bkh,bhl->bkl', wb, m_ref[...],
                        preferred_element_type=jnp.float32)        # (Bt, 2, L)

    mask = mask_ref[...]                                           # (Bt, L)
    masked = jnp.where(mask[:, None, :] > 0.0, logits, jnp.float32(-1e30))

    # One fused masked log-softmax over the lane (seq) axis for both pointers.
    mx = jnp.max(masked, axis=-1, keepdims=True)                   # (Bt, 2, 1)
    shifted = masked - mx
    denom = jnp.sum(jnp.exp(shifted), axis=-1, keepdims=True)
    out_ref[...] = (shifted - jnp.log(denom)).astype(out_ref.dtype)


def bidaf_output(m0, m1, m2, mask, w1_weight, w2_weight, *,
                 compute_dtype=jnp.bfloat16, b_tile=None):
    """BiDAFOutput forward.

    m0/m1/m2: (B, L, H); mask: (B, L) 0/1; w*_weight: (1, 2H) torch-layout.
    Returns (log_p1, log_p2), each (B, L) float32.
    """
    B, L, H = m0.shape
    assert m1.shape == (B, L, H) and m2.shape == (B, L, H)
    assert mask.shape == (B, L)
    assert w1_weight.shape == (1, 2 * H) and w2_weight.shape == (1, 2 * H)

    # Torch Linear(2H, 1) weight (1, 2H): first H entries hit m_0, last H hit
    # m_1 (logits_1) / m_2 (logits_2).  Pack into one (2, 3H) weight matching
    # the [m0; m1; m2] feature packing below.
    w1 = w1_weight.reshape(2, H).astype(jnp.float32)
    w2 = w2_weight.reshape(2, H).astype(jnp.float32)
    zeros = jnp.zeros((H,), jnp.float32)
    w_pack = jnp.stack([
        jnp.concatenate([w1[0], w1[1], zeros]),     # logits_1 <- m0, m1
        jnp.concatenate([w2[0], zeros, w2[1]]),     # logits_2 <- m0, m2
    ]).astype(compute_dtype)                         # (2, 3H)

    in_dsize = jnp.dtype(compute_dtype).itemsize
    Lp = _round_up(L, 128)
    vmem_limit = _vmem_limit_bytes()
    if b_tile is None:
        b_tile = _choose_b_tile(B, 3 * H, Lp, in_dsize, vmem_limit)
    Bp = _round_up(B, b_tile)

    # Pack the m tensors along H and transpose to the lane-dense (B, 3H, L)
    # layout; pad batch to a multiple of b_tile and L to a multiple of 128
    # (padded positions are masked out and sliced off below).
    # TODO(synk): in production the upstream producer should emit this packed
    # (B, 3H, L) layout directly so the transpose/concat is not an extra HBM pass.
    m_pack = jnp.swapaxes(jnp.concatenate([m0, m1, m2], axis=-1), 1, 2)
    m_pack = jnp.pad(m_pack.astype(compute_dtype),
                     ((0, Bp - B), (0, 0), (0, Lp - L)))
    mask_f = jnp.pad(mask.astype(jnp.float32), ((0, Bp - B), (0, Lp - L)))

    grid = (Bp // b_tile,)
    cost = pl.CostEstimate(
        flops=2 * Bp * 2 * (3 * H) * Lp,
        transcendentals=Bp * 2 * Lp,
        bytes_accessed=(Bp * 3 * H * Lp * in_dsize     # m stream (dominant)
                        + Bp * Lp * 4                  # mask
                        + Bp * 2 * Lp * 4              # output
                        + 2 * 3 * H * in_dsize))       # weights

    out = pl.pallas_call(
        _bidaf_output_kernel,
        out_shape=jax.ShapeDtypeStruct((Bp, 2, Lp), jnp.float32),
        grid_spec=pltpu.PrefetchScalarGridSpec(
            num_scalar_prefetch=0,
            grid=grid,
            in_specs=[
                pl.BlockSpec((b_tile, 3 * H, Lp), lambda b: (b, 0, 0)),
                pl.BlockSpec((b_tile, Lp), lambda b: (b, 0)),
                pl.BlockSpec((2, 3 * H), lambda b: (0, 0)),   # resident weights
            ],
            out_specs=pl.BlockSpec((b_tile, 2, Lp), lambda b: (b, 0, 0))),
        compiler_params=pltpu.CompilerParams(
            dimension_semantics=("parallel",),
            vmem_limit_bytes=vmem_limit),
        cost_estimate=cost,
    )(m_pack, mask_f, w_pack)

    return out[:B, 0, :L], out[:B, 1, :L]


def _reference(m0, m1, m2, mask, w1_weight, w2_weight):
    mask_f = mask.astype(jnp.float32)
    hi = jax.lax.Precision.HIGHEST
    logits1 = jnp.einsum('blk,k->bl', jnp.concatenate([m0, m1], axis=2),
                         w1_weight.reshape(-1), precision=hi)
    logits2 = jnp.einsum('blk,k->bl', jnp.concatenate([m0, m2], axis=2),
                         w2_weight.reshape(-1), precision=hi)

    def mls(logits):
        masked = mask_f * logits + (1.0 - mask_f) * (-1e30)
        return jax.nn.log_softmax(masked, axis=-1)

    return mls(logits1), mls(logits2)


if __name__ == "__main__":
    B, L, H = 2, 128, 32   # batch, seq_len, hidden_size (small demo shapes)

    key = jax.random.PRNGKey(0)
    k0, k1, k2, kw1, kw2 = jax.random.split(key, 5)

    m0 = jax.random.normal(k0, (B, L, H), dtype=jnp.float32)
    m1 = jax.random.normal(k1, (B, L, H), dtype=jnp.float32)
    m2 = jax.random.normal(k2, (B, L, H), dtype=jnp.float32)

    # torch-style Linear(2H, 1, bias=False) init: U(-1/sqrt(2H), 1/sqrt(2H))
    bound = 1.0 / np.sqrt(2 * H)
    w1_weight = jax.random.uniform(kw1, (1, 2 * H), jnp.float32, -bound, bound)
    w2_weight = jax.random.uniform(kw2, (1, 2 * H), jnp.float32, -bound, bound)

    # Padding mask: first `len[b]` positions valid.
    lengths = np.array([100, 64], dtype=np.int32)
    mask = jnp.asarray((np.arange(L)[None, :] < lengths[:, None]).astype(np.float32))

    # --- f32 compute path ---
    lp1, lp2 = bidaf_output(m0, m1, m2, mask, w1_weight, w2_weight,
                            compute_dtype=jnp.float32)
    jax.block_until_ready((lp1, lp2))
    r1, r2 = _reference(m0, m1, m2, mask, w1_weight, w2_weight)
    if not (np.allclose(np.asarray(lp1), np.asarray(r1), rtol=5e-3, atol=5e-3)
            and np.allclose(np.asarray(lp2), np.asarray(r2), rtol=5e-3, atol=5e-3)):
        raise AssertionError("Pallas kernel (f32) output does not match reference")

    # --- default bf16 path (halved HBM traffic; MXU bf16, f32 accumulation) ---
    lp1b, lp2b = bidaf_output(m0, m1, m2, mask, w1_weight, w2_weight)
    jax.block_until_ready((lp1b, lp2b))
    rb = lambda x: x.astype(jnp.bfloat16).astype(jnp.float32)
    r1b, r2b = _reference(rb(m0), rb(m1), rb(m2), mask, rb(w1_weight), rb(w2_weight))
    if not (np.allclose(np.asarray(lp1b), np.asarray(r1b), rtol=1e-2, atol=5e-3)
            and np.allclose(np.asarray(lp2b), np.asarray(r2b), rtol=1e-2, atol=5e-3)):
        raise AssertionError("Pallas kernel (bf16) output does not match reference")

    print("KERNEL_OK")
</pallas_src>

<mosaic_0001>
module attributes {stable_mosaic.version = 11 : i64} {
  func.func @_bidaf_output_kernel(%arg0: i32, %arg1: memref<8x96x128xf32, #tpu.memory_space<vmem>>, %arg2: memref<8x128xf32, #tpu.memory_space<vmem>>, %arg3: memref<2x96xf32, #tpu.memory_space<vmem>>, %arg4: memref<8x2x128xf32, #tpu.memory_space<vmem>>) attributes {dimension_semantics = [#tpu.dimension_semantics<parallel>], iteration_bounds = array<i64: 1>, scalar_prefetch = 0 : i64, scratch_operands = 0 : i64, tpu.core_type = #tpu.core_type<tc>, window_params = [{transform_indices = @transform_0, window_bounds = array<i64: 8, 96, 128>}, {transform_indices = @transform_1, window_bounds = array<i64: 8, 128>}, {pipeline_mode = #tpu.pipeline_mode<synchronous>, transform_indices = @transform_2, window_bounds = array<i64: 2, 96>}, {transform_indices = @transform_3, window_bounds = array<i64: 8, 2, 128>}]} {
    %c0 = arith.constant 0 : index
    %c0_0 = arith.constant 0 : index
    %0 = vector.load %arg3[%c0, %c0_0] : memref<2x96xf32, #tpu.memory_space<vmem>>, vector<2x96xf32>
    %1 = vector.shape_cast %0 : vector<2x96xf32> to vector<1x2x96xf32>
    %2 = vector.shape_cast %1 : vector<1x2x96xf32> to vector<1x2x96xf32>
    %3 = vector.broadcast %2 : vector<1x2x96xf32> to vector<8x2x96xf32>
    %c0_1 = arith.constant 0 : index
    %c0_2 = arith.constant 0 : index
    %c0_3 = arith.constant 0 : index
    %4 = vector.load %arg1[%c0_1, %c0_2, %c0_3] : memref<8x96x128xf32, #tpu.memory_space<vmem>>, vector<8x96x128xf32>
    "tpu.trace_start"() <{level = 10 : i32, message = "bkh,bhl->bkl"}> : () -> ()
    %cst = arith.constant dense<0.000000e+00> : vector<8x2x128xf32>
    %5 = tpu.matmul %3, %4, %cst {dimension_numbers = #tpu.dot_dimension_numbers<[2], [1], [1], [2], [0, 0, 0, 1, 1, 2], [0], [0]>} : vector<8x2x96xf32>, vector<8x96x128xf32>, vector<8x2x128xf32> -> vector<8x2x128xf32>
    "tpu.trace_stop"() : () -> ()
    %c0_4 = arith.constant 0 : index
    %c0_5 = arith.constant 0 : index
    %6 = vector.load %arg2[%c0_4, %c0_5] : memref<8x128xf32, #tpu.memory_space<vmem>>, vector<8x128xf32>
    %7 = vector.shape_cast %6 : vector<8x128xf32> to vector<8x1x128xf32>
    %cst_6 = arith.constant 0.000000e+00 : f32
    %8 = vector.broadcast %cst_6 : f32 to vector<8x1x128xf32>
    %9 = arith.cmpf ogt, %7, %8 : vector<8x1x128xf32>
    %cst_7 = arith.constant -1.000000e+30 : f32
    %10 = vector.shape_cast %9 : vector<8x1x128xi1> to vector<8x1x128xi1>
    %11 = vector.broadcast %10 : vector<8x1x128xi1> to vector<8x2x128xi1>
    %12 = vector.broadcast %cst_7 : f32 to vector<8x2x128xf32>
    %13 = arith.select %11, %5, %12 : vector<8x2x128xi1>, vector<8x2x128xf32>
    %cst_8 = arith.constant dense<0xFF800000> : vector<8x2xf32>
    %14 = vector.multi_reduction <maximumf>, %13, %cst_8 [2] : vector<8x2x128xf32> to vector<8x2xf32>
    %15 = vector.shape_cast %14 : vector<8x2xf32> to vector<8x2x1xf32>
    %16 = vector.broadcast %15 : vector<8x2x1xf32> to vector<8x2x128xf32>
    %17 = arith.subf %13, %16 : vector<8x2x128xf32>
    %18 = math.exp %17 : vector<8x2x128xf32>
    %cst_9 = arith.constant dense<0.000000e+00> : vector<8x2xf32>
    %19 = vector.multi_reduction <add>, %18, %cst_9 [2] : vector<8x2x128xf32> to vector<8x2xf32>
    %20 = vector.shape_cast %19 : vector<8x2xf32> to vector<8x2x1xf32>
    %21 = math.log %20 : vector<8x2x1xf32>
    %22 = vector.broadcast %21 : vector<8x2x1xf32> to vector<8x2x128xf32>
    %23 = arith.subf %17, %22 : vector<8x2x128xf32>
    %c0_10 = arith.constant 0 : index
    %c0_11 = arith.constant 0 : index
    %c0_12 = arith.constant 0 : index
    %24 = vector.load %arg4[%c0_10, %c0_11, %c0_12] : memref<8x2x128xf32, #tpu.memory_space<vmem>>, vector<8x2x128xf32>
    tpu.vector_store %arg4[%c0_10, %c0_11, %c0_12], %23 {strides = array<i32>} : memref<8x2x128xf32, #tpu.memory_space<vmem>>, vector<8x2x128xf32>,
    return
  }
  func.func @transform_0(%arg0: i32) -> (i32, i32, i32) {
    %c0_i32 = arith.constant 0 : i32
    %c0_i32_0 = arith.constant 0 : i32
    %c0_i32_1 = arith.constant 0 : i32
    return %arg0, %c0_i32, %c0_i32_0 : i32, i32, i32
  }
  func.func @transform_1(%arg0: i32) -> (i32, i32) {
    %c0_i32 = arith.constant 0 : i32
    %c0_i32_0 = arith.constant 0 : i32
    return %arg0, %c0_i32 : i32, i32
  }
  func.func @transform_2(%arg0: i32) -> (i32, i32) {
    %c0_i32 = arith.constant 0 : i32
    %c0_i32_0 = arith.constant 0 : i32
    %c0_i32_1 = arith.constant 0 : i32
    return %c0_i32, %c0_i32_0 : i32, i32
  }
  func.func @transform_3(%arg0: i32) -> (i32, i32, i32) {
    %c0_i32 = arith.constant 0 : i32
    %c0_i32_0 = arith.constant 0 : i32
    %c0_i32_1 = arith.constant 0 : i32
    return %arg0, %c0_i32, %c0_i32_0 : i32, i32, i32
  }
}

</mosaic_0001>

<llo_original>
// kernel: tpu_custom_call.1
$region0: #{tpu_custom_call.1}
  #allocation0 [shape = 'u32[]', space=smem, size = 0x4, offset = 0x4, fixed_abs, tag = 'smem constant byte address 0x4 - core index']
  #allocation1 [shape = 'u32[144,128]{1,0:T(1,128)}', space=vmem, size = 0x12000, scoped, tag = 'internal scratch']
  %s0 = inlined_call_operand.hbm [shape: f32[8,96,128], index: 0, kind: input, shape index: {}]
  %s1 = inlined_call_operand.hbm [shape: f32[8,128], index: 1, kind: input, shape index: {}]
  %s2 = inlined_call_operand.vmem [shape: f32[2,96], index: 2, kind: input, shape index: {}]
  %s3 = inlined_call_operand.hbm [shape: f32[8,2,128], index: 3, kind: output, shape index: {}]
  %s4 = sld [smem:[#allocation0]]
  $region30: #{tpu_custom_call.1} parent=0
    _
  %s6 = ssub.s32 1, %s4
  %s7 = scalar_select 0, %s6, %s4
  $region1: #{tpu_custom_call.1} parent=0
    #allocation2 [shape = 'u8[393216]{0}', space=vmem, size = 0x60000, scoped, tag = 'input window, operand 0, single buffered']
    #allocation3 [shape = 's32[1]{0}', space=sflag, size = 0x4, scoped, tag = 'scoped memory for tpu_custom_call.1']
    #allocation4 [shape = 's32[1]{0}', space=sflag, size = 0x4, scoped, tag = 'scoped memory for tpu_custom_call.1']
    #allocation5 [shape = 'u8[4096]{0}', space=vmem, size = 0x1000, scoped, tag = 'input window, operand 1, single buffered']
    #allocation6 [shape = 's32[1]{0}', space=sflag, size = 0x4, scoped, tag = 'scoped memory for tpu_custom_call.1']
    #allocation7 [shape = 'u8[8192]{0}', space=vmem, size = 0x2000, scoped, tag = 'output window, operand 0, single buffered']
    %8 = vsyncpa [#allocation3], 0
    %9 = vsyncpa [#allocation6], 0
    %10 = vsyncpa [#allocation4], 0
    // Predicated region
    $region2: #{tpu_custom_call.1} parent=1 // pred_check
      _
    $region3: #{tpu_custom_call.1} parent=1 // pred_check_branch
      %12 = sbr.rel (0) target = $region5
    $region4: #{tpu_custom_call.1} parent=1 // pred_region
      %s14 = ssub.s32 12288, 12288
      %15 = vsyncadd [#allocation3], %s14
      %s16 = sshll.u32 [#allocation2], 4
      %s17 = int_to_ptr.vmem [resolvable:$true] %s16
      %22 = dma.hbm_to_vmem [thread:$0]  %s0, 12288, %s17, [#allocation3], 128, 128, 8
    $region5: #{tpu_custom_call.1} parent=1 // pred_fallthru
      _
    // Predicated region
    $region6: #{tpu_custom_call.1} parent=1 // pred_check
      _
    $region7: #{tpu_custom_call.1} parent=1 // pred_check_branch
      %24 = sbr.rel (0) target = $region9
    $region8: #{tpu_custom_call.1} parent=1 // pred_region
      %s26 = ssub.s32 128, 128
      %27 = vsyncadd [#allocation6], %s26
      %s29 = sshll.u32 [#allocation5], 4
      %s30 = int_to_ptr.vmem [resolvable:$true] %s29
      %32 = dma.hbm_to_vmem [thread:$0]  %s1, 128, %s30, [#allocation6]
    $region9: #{tpu_custom_call.1} parent=1 // pred_fallthru
      _
    // Predicated region
    $region10: #{tpu_custom_call.1} parent=1 // pred_check
      _
    $region11: #{tpu_custom_call.1} parent=1 // pred_check_branch
      %34 = sbr.rel (0) target = $region13
    $region12: #{tpu_custom_call.1} parent=1 // pred_region
      _
    $region13: #{tpu_custom_call.1} parent=1 // pred_fallthru
      _
    // Predicated region
    $region14: #{tpu_custom_call.1} parent=1 // pred_check
      _
    $region15: #{tpu_custom_call.1} parent=1 // pred_check_branch
      %36 = sbr.rel (0) target = $region17
    $region16: #{tpu_custom_call.1} parent=1 // pred_region
      %37 = dma.done [#allocation3], 12288
    $region17: #{tpu_custom_call.1} parent=1 // pred_fallthru
      _
    // Predicated region
    $region18: #{tpu_custom_call.1} parent=1 // pred_check
      _
    $region19: #{tpu_custom_call.1} parent=1 // pred_check_branch
      %39 = sbr.rel (0) target = $region21
    $region20: #{tpu_custom_call.1} parent=1 // pred_region
      %40 = dma.done [#allocation6], 128
    $region21: #{tpu_custom_call.1} parent=1 // pred_fallthru
      _
    %v41 = vld [vmem:[%s2] sm:$0x3]
    %v42 = vld [vmem:[#allocation2] sm:$0xff]
    %v43 = vld [vmem:[#allocation2 + $0x8] sm:$0xff]
    %v44 = vld [vmem:[#allocation2 + $0x10] sm:$0xff]
    %v45 = vld [vmem:[#allocation2 + $0x18] sm:$0xff]
    %v46 = vld [vmem:[#allocation2 + $0x20] sm:$0xff]
    %v47 = vld [vmem:[#allocation2 + $0x28] sm:$0xff]
    %v48 = vld [vmem:[#allocation2 + $0x30] sm:$0xff]
    %v49 = vld [vmem:[#allocation2 + $0x38] sm:$0xff]
    %v50 = vld [vmem:[#allocation2 + $0x40] sm:$0xff]
    %v51 = vld [vmem:[#allocation2 + $0x48] sm:$0xff]
    %v52 = vld [vmem:[#allocation2 + $0x50] sm:$0xff]
    %v53 = vld [vmem:[#allocation2 + $0x58] sm:$0xff]
    %v54 = vld [vmem:[#allocation2 + $0x60] sm:$0xff]
    %v55 = vld [vmem:[#allocation2 + $0x68] sm:$0xff]
    %v56 = vld [vmem:[#allocation2 + $0x70] sm:$0xff]
    %v57 = vld [vmem:[#allocation2 + $0x78] sm:$0xff]
    %v58 = vld [vmem:[#allocation2 + $0x80] sm:$0xff]
    %v59 = vld [vmem:[#allocation2 + $0x88] sm:$0xff]
    %v60 = vld [vmem:[#allocation2 + $0x90] sm:$0xff]
    %v61 = vld [vmem:[#allocation2 + $0x98] sm:$0xff]
    %v62 = vld [vmem:[#allocation2 + $0xa0] sm:$0xff]
    %v63 = vld [vmem:[#allocation2 + $0xa8] sm:$0xff]
    %v64 = vld [vmem:[#allocation2 + $0xb0] sm:$0xff]
    %v65 = vld [vmem:[#allocation2 + $0xb8] sm:$0xff]
    %v66 = vld [vmem:[#allocation2 + $0xc0] sm:$0xff]
    %v67 = vld [vmem:[#allocation2 + $0xc8] sm:$0xff]
    %v68 = vld [vmem:[#allocation2 + $0xd0] sm:$0xff]
    %v69 = vld [vmem:[#allocation2 + $0xd8] sm:$0xff]
    %v70 = vld [vmem:[#allocation2 + $0xe0] sm:$0xff]
    %v71 = vld [vmem:[#allocation2 + $0xe8] sm:$0xff]
    %v72 = vld [vmem:[#allocation2 + $0xf0] sm:$0xff]
    %v73 = vld [vmem:[#allocation2 + $0xf8] sm:$0xff]
    %v74 = vld [vmem:[#allocation2 + $0x100] sm:$0xff]
    %v75 = vld [vmem:[#allocation2 + $0x108] sm:$0xff]
    %v76 = vld [vmem:[#allocation2 + $0x110] sm:$0xff]
    %v77 = vld [vmem:[#allocation2 + $0x118] sm:$0xff]
    %v78 = vld [vmem:[#allocation2 + $0x120] sm:$0xff]
    %v79 = vld [vmem:[#allocation2 + $0x128] sm:$0xff]
    %v80 = vld [vmem:[#allocation2 + $0x130] sm:$0xff]
    %v81 = vld [vmem:[#allocation2 + $0x138] sm:$0xff]
    %v82 = vld [vmem:[#allocation2 + $0x140] sm:$0xff]
    %v83 = vld [vmem:[#allocation2 + $0x148] sm:$0xff]
    %v84 = vld [vmem:[#allocation2 + $0x150] sm:$0xff]
    %v85 = vld [vmem:[#allocation2 + $0x158] sm:$0xff]
    %v86 = vld [vmem:[#allocation2 + $0x160] sm:$0xff]
    %v87 = vld [vmem:[#allocation2 + $0x168] sm:$0xff]
    %v88 = vld [vmem:[#allocation2 + $0x170] sm:$0xff]
    %v89 = vld [vmem:[#allocation2 + $0x178] sm:$0xff]
    %v90 = vld [vmem:[#allocation2 + $0x180] sm:$0xff]
    %v91 = vld [vmem:[#allocation2 + $0x188] sm:$0xff]
    %v92 = vld [vmem:[#allocation2 + $0x190] sm:$0xff]
    %v93 = vld [vmem:[#allocation2 + $0x198] sm:$0xff]
    %v94 = vld [vmem:[#allocation2 + $0x1a0] sm:$0xff]
    %v95 = vld [vmem:[#allocation2 + $0x1a8] sm:$0xff]
    %v96 = vld [vmem:[#allocation2 + $0x1b0] sm:$0xff]
    %v97 = vld [vmem:[#allocation2 + $0x1b8] sm:$0xff]
    %v98 = vld [vmem:[#allocation2 + $0x1c0] sm:$0xff]
    %v99 = vld [vmem:[#allocation2 + $0x1c8] sm:$0xff]
    %v100 = vld [vmem:[#allocation2 + $0x1d0] sm:$0xff]
    %v101 = vld [vmem:[#allocation2 + $0x1d8] sm:$0xff]
    %v102 = vld [vmem:[#allocation2 + $0x1e0] sm:$0xff]
    %v103 = vld [vmem:[#allocation2 + $0x1e8] sm:$0xff]
    %v104 = vld [vmem:[#allocation2 + $0x1f0] sm:$0xff]
    %v105 = vld [vmem:[#allocation2 + $0x1f8] sm:$0xff]
    %v106 = vld [vmem:[#allocation2 + $0x200] sm:$0xff]
    %v107 = vld [vmem:[#allocation2 + $0x208] sm:$0xff]
    %v108 = vld [vmem:[#allocation2 + $0x210] sm:$0xff]
    %v109 = vld [vmem:[#allocation2 + $0x218] sm:$0xff]
    %v110 = vld [vmem:[#allocation2 + $0x220] sm:$0xff]
    %v111 = vld [vmem:[#allocation2 + $0x228] sm:$0xff]
    %v112 = vld [vmem:[#allocation2 + $0x230] sm:$0xff]
    %v113 = vld [vmem:[#allocation2 + $0x238] sm:$0xff]
    %v114 = vld [vmem:[#allocation2 + $0x240] sm:$0xff]
    %v115 = vld [vmem:[#allocation2 + $0x248] sm:$0xff]
    %v116 = vld [vmem:[#allocation2 + $0x250] sm:$0xff]
    %v117 = vld [vmem:[#allocation2 + $0x258] sm:$0xff]
    %v118 = vld [vmem:[#allocation2 + $0x260] sm:$0xff]
    %v119 = vld [vmem:[#allocation2 + $0x268] sm:$0xff]
    %v120 = vld [vmem:[#allocation2 + $0x270] sm:$0xff]
    %v121 = vld [vmem:[#allocation2 + $0x278] sm:$0xff]
    %v122 = vld [vmem:[#allocation2 + $0x280] sm:$0xff]
    %v123 = vld [vmem:[#allocation2 + $0x288] sm:$0xff]
    %v124 = vld [vmem:[#allocation2 + $0x290] sm:$0xff]
    %v125 = vld [vmem:[#allocation2 + $0x298] sm:$0xff]
    %v126 = vld [vmem:[#allocation2 + $0x2a0] sm:$0xff]
    %v127 = vld [vmem:[#allocation2 + $0x2a8] sm:$0xff]
    %v128 = vld [vmem:[#allocation2 + $0x2b0] sm:$0xff]
    %v129 = vld [vmem:[#allocation2 + $0x2b8] sm:$0xff]
    %v130 = vld [vmem:[#allocation2 + $0x2c0] sm:$0xff]
    %v131 = vld [vmem:[#allocation2 + $0x2c8] sm:$0xff]
    %v132 = vld [vmem:[#allocation2 + $0x2d0] sm:$0xff]
    %v133 = vld [vmem:[#allocation2 + $0x2d8] sm:$0xff]
    %v134 = vld [vmem:[#allocation2 + $0x2e0] sm:$0xff]
    %v135 = vld [vmem:[#allocation2 + $0x2e8] sm:$0xff]
    %v136 = vld [vmem:[#allocation2 + $0x2f0] sm:$0xff]
    %v137 = vld [vmem:[#allocation2 + $0x2f8] sm:$0xff]
    %vm138 = vcmask 785408
    %v140 = vsel %vm138, %v41, 0
    %142 = vmatprep.subr.mxu0 0.0
    %143 = vmatpush1.msra.mxu0 %v42
    %144 = vmatprep.subr.mxu0 0.0
    %145 = vmatpush1.msra.mxu0 %v43
    %146 = vmatprep.subr.mxu0 0.0
    %147 = vmatpush1.msra.mxu0 %v44
    %148 = vmatprep.subr.mxu0 0.0
    %149 = vmatpush1.msra.mxu0 %v45
    %150 = vmatprep.subr.mxu0 0.0
    %151 = vmatpush1.msra.mxu0 %v46
    %152 = vmatprep.subr.mxu0 0.0
    %153 = vmatpush1.msra.mxu0 %v47
    %154 = vmatprep.subr.mxu0 0.0
    %155 = vmatpush1.msra.mxu0 %v48
    %156 = vmatprep.subr.mxu0 0.0
    %157 = vmatpush1.msra.mxu0 %v49
    %158 = vmatprep.subr.mxu0 0.0
    %159 = vmatpush1.msra.mxu0 %v50
    %160 = vmatprep.subr.mxu0 0.0
    %161 = vmatpush1.msra.mxu0 %v51
    %162 = vmatprep.subr.mxu0 0.0
    %163 = vmatpush1.msra.mxu0 %v52
    %164 = vmatprep.subr.mxu0 0.0
    %165 = vmatpush1.msra.mxu0 %v53
    %166 = vmatprep.subr.mxu0 0.0
    %167 = vmatpush1.msra.mxu0 0.0
    %168 = vmatprep.subr.mxu0 0.0
    %169 = vmatpush1.msra.mxu0 0.0
    %170 = vmatprep.subr.mxu0 0.0
    %171 = vmatpush1.msra.mxu0 0.0
    %172 = vmatprep.subr.mxu0 0.0
    %173 = vmatpush1.msra.mxu0 0.0
    %174 = vmatprep.subr.mxu0 0.0
    %175 = vmatpush1.msra.mxu0 0.0
    %176 = vmatprep.subr.mxu0 0.0
    %177 = vmatpush1.msra.mxu0 0.0
    %178 = vmatprep.subr.mxu0 0.0
    %179 = vmatpush1.msra.mxu0 0.0
    %180 = vmatprep.subr.mxu0 0.0
    %181 = vmatpush1.msra.mxu0 0.0
    %182 = vmatprep.subr.mxu0 0.0
    %183 = vmatpush1.msra.mxu0 0.0
    %184 = vmatprep.subr.mxu0 0.0
    %185 = vmatpush1.msra.mxu0 0.0
    %186 = vmatprep.subr.mxu0 0.0
    %187 = vmatpush1.msra.mxu0 0.0
    %188 = vmatprep.subr.mxu0 0.0
    %189 = vmatpush1.msra.mxu0 0.0
    %190 = vmatprep.subr.mxu0 0.0
    %191 = vmatpush1.msra.mxu0 0.0
    %192 = vmatprep.subr.mxu0 0.0
    %193 = vmatpush1.msra.mxu0 0.0
    %194 = vmatprep.subr.mxu0 0.0
    %195 = vmatpush1.msra.mxu0 0.0
    %196 = vmatprep.subr.mxu0 0.0
    %197 = vmatpush1.msra.mxu0 0.0
    %198 = vmatprep.subr.mxu0 0.0
    %199 = vmatpush1.msra.mxu0 0.0
    %200 = vmatprep.subr.mxu0 0.0
    %201 = vmatpush1.msra.mxu0 0.0
    %202 = vmatprep.subr.mxu0 0.0
    %203 = vmatpush1.msra.mxu0 0.0
    %204 = vmatprep.subr.mxu0 0.0
    %205 = vmatpush1.msra.mxu0 0.0
    %206 = vmatprep.mubr.f32.mxu0 0.0
    %207 = vmatmul.mubr.f32.gmra.mrb[0].mxu0 %v140
    %v208 = vpop.f32.mrb[0].mxu0
    %v209 = vadd.f32 0.0, %v208
    %v210 = vpop.f32.mrb[0].mxu0
    %211 = vdwg.mxu0
    %212 = vmatprep.subr.mxu0 0.0
    %213 = vmatpush1.msra.mxu0 %v54
    %214 = vmatprep.subr.mxu0 0.0
    %215 = vmatpush1.msra.mxu0 %v55
    %216 = vmatprep.subr.mxu0 0.0
    %217 = vmatpush1.msra.mxu0 %v56
    %218 = vmatprep.subr.mxu0 0.0
    %219 = vmatpush1.msra.mxu0 %v57
    %220 = vmatprep.subr.mxu0 0.0
    %221 = vmatpush1.msra.mxu0 %v58
    %222 = vmatprep.subr.mxu0 0.0
    %223 = vmatpush1.msra.mxu0 %v59
    %224 = vmatprep.subr.mxu0 0.0
    %225 = vmatpush1.msra.mxu0 %v60
    %226 = vmatprep.subr.mxu0 0.0
    %227 = vmatpush1.msra.mxu0 %v61
    %228 = vmatprep.subr.mxu0 0.0
    %229 = vmatpush1.msra.mxu0 %v62
    %230 = vmatprep.subr.mxu0 0.0
    %231 = vmatpush1.msra.mxu0 %v63
    %232 = vmatprep.subr.mxu0 0.0
    %233 = vmatpush1.msra.mxu0 %v64
    %234 = vmatprep.subr.mxu0 0.0
    %235 = vmatpush1.msra.mxu0 %v65
    %236 = vmatprep.subr.mxu0 0.0
    %237 = vmatpush1.msra.mxu0 0.0
    %238 = vmatprep.subr.mxu0 0.0
    %239 = vmatpush1.msra.mxu0 0.0
    %240 = vmatprep.subr.mxu0 0.0
    %241 = vmatpush1.msra.mxu0 0.0
    %242 = vmatprep.subr.mxu0 0.0
    %243 = vmatpush1.msra.mxu0 0.0
    %244 = vmatprep.subr.mxu0 0.0
    %245 = vmatpush1.msra.mxu0 0.0
    %246 = vmatprep.subr.mxu0 0.0
    %247 = vmatpush1.msra.mxu0 0.0
    %248 = vmatprep.subr.mxu0 0.0
    %249 = vmatpush1.msra.mxu0 0.0
    %250 = vmatprep.subr.mxu0 0.0
    %251 = vmatpush1.msra.mxu0 0.0
    %252 = vmatprep.subr.mxu0 0.0
    %253 = vmatpush1.msra.mxu0 0.0
    %254 = vmatprep.subr.mxu0 0.0
    %255 = vmatpush1.msra.mxu0 0.0
    %256 = vmatprep.subr.mxu0 0.0
    %257 = vmatpush1.msra.mxu0 0.0
    %258 = vmatprep.subr.mxu0 0.0
    %259 = vmatpush1.msra.mxu0 0.0
    %260 = vmatprep.subr.mxu0 0.0
    %261 = vmatpush1.msra.mxu0 0.0
    %262 = vmatprep.subr.mxu0 0.0
    %263 = vmatpush1.msra.mxu0 0.0
    %264 = vmatprep.subr.mxu0 0.0
    %265 = vmatpush1.msra.mxu0 0.0
    %266 = vmatprep.subr.mxu0 0.0
    %267 = vmatpush1.msra.mxu0 0.0
    %268 = vmatprep.subr.mxu0 0.0
    %269 = vmatpush1.msra.mxu0 0.0
    %270 = vmatprep.subr.mxu0 0.0
    %271 = vmatpush1.msra.mxu0 0.0
    %272 = vmatprep.subr.mxu0 0.0
    %273 = vmatpush1.msra.mxu0 0.0
    %274 = vmatprep.subr.mxu0 0.0
    %275 = vmatpush1.msra.mxu0 0.0
    %276 = vmatprep.mubr.f32.mxu0 0.0
    %277 = vmatmul.mubr.f32.gmra.mrb[0].mxu0 %v140
    %v278 = vpop.f32.mrb[0].mxu0
    %v279 = vadd.f32 0.0, %v278
    %v280 = vpop.f32.mrb[0].mxu0
    %281 = vdwg.mxu0
    %282 = vmatprep.subr.mxu0 0.0
    %283 = vmatpush1.msra.mxu0 %v66
    %284 = vmatprep.subr.mxu0 0.0
    %285 = vmatpush1.msra.mxu0 %v67
    %286 = vmatprep.subr.mxu0 0.0
    %287 = vmatpush1.msra.mxu0 %v68
    %288 = vmatprep.subr.mxu0 0.0
    %289 = vmatpush1.msra.mxu0 %v69
    %290 = vmatprep.subr.mxu0 0.0
    %291 = vmatpush1.msra.mxu0 %v70
    %292 = vmatprep.subr.mxu0 0.0
    %293 = vmatpush1.msra.mxu0 %v71
    %294 = vmatprep.subr.mxu0 0.0
    %295 = vmatpush1.msra.mxu0 %v72
    %296 = vmatprep.subr.mxu0 0.0
    %297 = vmatpush1.msra.mxu0 %v73
    %298 = vmatprep.subr.mxu0 0.0
    %299 = vmatpush1.msra.mxu0 %v74
    %300 = vmatprep.subr.mxu0 0.0
    %301 = vmatpush1.msra.mxu0 %v75
    %302 = vmatprep.subr.mxu0 0.0
    %303 = vmatpush1.msra.mxu0 %v76
    %304 = vmatprep.subr.mxu0 0.0
    %305 = vmatpush1.msra.mxu0 %v77
    %306 = vmatprep.subr.mxu0 0.0
    %307 = vmatpush1.msra.mxu0 0.0
    %308 = vmatprep.subr.mxu0 0.0
    %309 = vmatpush1.msra.mxu0 0.0
    %310 = vmatprep.subr.mxu0 0.0
    %311 = vmatpush1.msra.mxu0 0.0
    %312 = vmatprep.subr.mxu0 0.0
    %313 = vmatpush1.msra.mxu0 0.0
    %314 = vmatprep.subr.mxu0 0.0
    %315 = vmatpush1.msra.mxu0 0.0
    %316 = vmatprep.subr.mxu0 0.0
    %317 = vmatpush1.msra.mxu0 0.0
    %318 = vmatprep.subr.mxu0 0.0
    %319 = vmatpush1.msra.mxu0 0.0
    %320 = vmatprep.subr.mxu0 0.0
    %321 = vmatpush1.msra.mxu0 0.0
    %322 = vmatprep.subr.mxu0 0.0
    %323 = vmatpush1.msra.mxu0 0.0
    %324 = vmatprep.subr.mxu0 0.0
    %325 = vmatpush1.msra.mxu0 0.0
    %326 = vmatprep.subr.mxu0 0.0
    %327 = vmatpush1.msra.mxu0 0.0
    %328 = vmatprep.subr.mxu0 0.0
    %329 = vmatpush1.msra.mxu0 0.0
    %330 = vmatprep.subr.mxu0 0.0
    %331 = vmatpush1.msra.mxu0 0.0
    %332 = vmatprep.subr.mxu0 0.0
    %333 = vmatpush1.msra.mxu0 0.0
    %334 = vmatprep.subr.mxu0 0.0
    %335 = vmatpush1.msra.mxu0 0.0
    %336 = vmatprep.subr.mxu0 0.0
    %337 = vmatpush1.msra.mxu0 0.0
    %338 = vmatprep.subr.mxu0 0.0
    %339 = vmatpush1.msra.mxu0 0.0
    %340 = vmatprep.subr.mxu0 0.0
    %341 = vmatpush1.msra.mxu0 0.0
    %342 = vmatprep.subr.mxu0 0.0
    %343 = vmatpush1.msra.mxu0 0.0
    %344 = vmatprep.subr.mxu0 0.0
    %345 = vmatpush1.msra.mxu0 0.0
    %346 = vmatprep.mubr.f32.mxu0 0.0
    %347 = vmatmul.mubr.f32.gmra.mrb[0].mxu0 %v140
    %v348 = vpop.f32.mrb[0].mxu0
    %v349 = vadd.f32 0.0, %v348
    %v350 = vpop.f32.mrb[0].mxu0
    %351 = vdwg.mxu0
    %352 = vmatprep.subr.mxu0 0.0
    %353 = vmatpush1.msra.mxu0 %v78
    %354 = vmatprep.subr.mxu0 0.0
    %355 = vmatpush1.msra.mxu0 %v79
    %356 = vmatprep.subr.mxu0 0.0
    %357 = vmatpush1.msra.mxu0 %v80
    %358 = vmatprep.subr.mxu0 0.0
    %359 = vmatpush1.msra.mxu0 %v81
    %360 = vmatprep.subr.mxu0 0.0
    %361 = vmatpush1.msra.mxu0 %v82
    %362 = vmatprep.subr.mxu0 0.0
    %363 = vmatpush1.msra.mxu0 %v83
    %364 = vmatprep.subr.mxu0 0.0
    %365 = vmatpush1.msra.mxu0 %v84
    %366 = vmatprep.subr.mxu0 0.0
    %367 = vmatpush1.msra.mxu0 %v85
    %368 = vmatprep.subr.mxu0 0.0
    %369 = vmatpush1.msra.mxu0 %v86
    %370 = vmatprep.subr.mxu0 0.0
    %371 = vmatpush1.msra.mxu0 %v87
    %372 = vmatprep.subr.mxu0 0.0
    %373 = vmatpush1.msra.mxu0 %v88
    %374 = vmatprep.subr.mxu0 0.0
    %375 = vmatpush1.msra.mxu0 %v89
    %376 = vmatprep.subr.mxu0 0.0
    %377 = vmatpush1.msra.mxu0 0.0
    %378 = vmatprep.subr.mxu0 0.0
    %379 = vmatpush1.msra.mxu0 0.0
    %380 = vmatprep.subr.mxu0 0.0
    %381 = vmatpush1.msra.mxu0 0.0
    %382 = vmatprep.subr.mxu0 0.0
    %383 = vmatpush1.msra.mxu0 0.0
    %384 = vmatprep.subr.mxu0 0.0
    %385 = vmatpush1.msra.mxu0 0.0
    %386 = vmatprep.subr.mxu0 0.0
    %387 = vmatpush1.msra.mxu0 0.0
    %388 = vmatprep.subr.mxu0 0.0
    %389 = vmatpush1.msra.mxu0 0.0
    %390 = vmatprep.subr.mxu0 0.0
    %391 = vmatpush1.msra.mxu0 0.0
    %392 = vmatprep.subr.mxu0 0.0
    %393 = vmatpush1.msra.mxu0 0.0
    %394 = vmatprep.subr.mxu0 0.0
    %395 = vmatpush1.msra.mxu0 0.0
    %396 = vmatprep.subr.mxu0 0.0
    %397 = vmatpush1.msra.mxu0 0.0
    %398 = vmatprep.subr.mxu0 0.0
    %399 = vmatpush1.msra.mxu0 0.0
    %400 = vmatprep.subr.mxu0 0.0
    %401 = vmatpush1.msra.mxu0 0.0
    %402 = vmatprep.subr.mxu0 0.0
    %403 = vmatpush1.msra.mxu0 0.0
    %404 = vmatprep.subr.mxu0 0.0
    %405 = vmatpush1.msra.mxu0 0.0
    %406 = vmatprep.subr.mxu0 0.0
    %407 = vmatpush1.msra.mxu0 0.0
    %408 = vmatprep.subr.mxu0 0.0
    %409 = vmatpush1.msra.mxu0 0.0
    %410 = vmatprep.subr.mxu0 0.0
    %411 = vmatpush1.msra.mxu0 0.0
    %412 = vmatprep.subr.mxu0 0.0
    %413 = vmatpush1.msra.mxu0 0.0
    %414 = vmatprep.subr.mxu0 0.0
    %415 = vmatpush1.msra.mxu0 0.0
    %416 = vmatprep.mubr.f32.mxu0 0.0
    %417 = vmatmul.mubr.f32.gmra.mrb[0].mxu0 %v140
    %v418 = vpop.f32.mrb[0].mxu0
    %v419 = vadd.f32 0.0, %v418
    %v420 = vpop.f32.mrb[0].mxu0
    %421 = vdwg.mxu0
    %422 = vmatprep.subr.mxu0 0.0
    %423 = vmatpush1.msra.mxu0 %v90
    %424 = vmatprep.subr.mxu0 0.0
    %425 = vmatpush1.msra.mxu0 %v91
    %426 = vmatprep.subr.mxu0 0.0
    %427 = vmatpush1.msra.mxu0 %v92
    %428 = vmatprep.subr.mxu0 0.0
    %429 = vmatpush1.msra.mxu0 %v93
    %430 = vmatprep.subr.mxu0 0.0
    %431 = vmatpush1.msra.mxu0 %v94
    %432 = vmatprep.subr.mxu0 0.0
    %433 = vmatpush1.msra.mxu0 %v95
    %434 = vmatprep.subr.mxu0 0.0
    %435 = vmatpush1.msra.mxu0 %v96
    %436 = vmatprep.subr.mxu0 0.0
    %437 = vmatpush1.msra.mxu0 %v97
    %438 = vmatprep.subr.mxu0 0.0
    %439 = vmatpush1.msra.mxu0 %v98
    %440 = vmatprep.subr.mxu0 0.0
    %441 = vmatpush1.msra.mxu0 %v99
    %442 = vmatprep.subr.mxu0 0.0
    %443 = vmatpush1.msra.mxu0 %v100
    %444 = vmatprep.subr.mxu0 0.0
    %445 = vmatpush1.msra.mxu0 %v101
    %446 = vmatprep.subr.mxu0 0.0
    %447 = vmatpush1.msra.mxu0 0.0
    %448 = vmatprep.subr.mxu0 0.0
    %449 = vmatpush1.msra.mxu0 0.0
    %450 = vmatprep.subr.mxu0 0.0
    %451 = vmatpush1.msra.mxu0 0.0
    %452 = vmatprep.subr.mxu0 0.0
    %453 = vmatpush1.msra.mxu0 0.0
    %454 = vmatprep.subr.mxu0 0.0
    %455 = vmatpush1.msra.mxu0 0.0
    %456 = vmatprep.subr.mxu0 0.0
    %457 = vmatpush1.msra.mxu0 0.0
    %458 = vmatprep.subr.mxu0 0.0
    %459 = vmatpush1.msra.mxu0 0.0
    %460 = vmatprep.subr.mxu0 0.0
    %461 = vmatpush1.msra.mxu0 0.0
    %462 = vmatprep.subr.mxu0 0.0
    %463 = vmatpush1.msra.mxu0 0.0
    %464 = vmatprep.subr.mxu0 0.0
    %465 = vmatpush1.msra.mxu0 0.0
    %466 = vmatprep.subr.mxu0 0.0
    %467 = vmatpush1.msra.mxu0 0.0
    %468 = vmatprep.subr.mxu0 0.0
    %469 = vmatpush1.msra.mxu0 0.0
    %470 = vmatprep.subr.mxu0 0.0
    %471 = vmatpush1.msra.mxu0 0.0
    %472 = vmatprep.subr.mxu0 0.0
    %473 = vmatpush1.msra.mxu0 0.0
    %474 = vmatprep.subr.mxu0 0.0
    %475 = vmatpush1.msra.mxu0 0.0
    %476 = vmatprep.subr.mxu0 0.0
    %477 = vmatpush1.msra.mxu0 0.0
    %478 = vmatprep.subr.mxu0 0.0
    %479 = vmatpush1.msra.mxu0 0.0
    %480 = vmatprep.subr.mxu0 0.0
    %481 = vmatpush1.msra.mxu0 0.0
    %482 = vmatprep.subr.mxu0 0.0
    %483 = vmatpush1.msra.mxu0 0.0
    %484 = vmatprep.subr.mxu0 0.0
    %485 = vmatpush1.msra.mxu0 0.0
    %486 = vmatprep.mubr.f32.mxu0 0.0
    %487 = vmatmul.mubr.f32.gmra.mrb[0].mxu0 %v140
    %v488 = vpop.f32.mrb[0].mxu0
    %v489 = vadd.f32 0.0, %v488
    %v490 = vpop.f32.mrb[0].mxu0
    %491 = vdwg.mxu0
    %492 = vmatprep.subr.mxu0 0.0
    %493 = vmatpush1.msra.mxu0 %v102
    %494 = vmatprep.subr.mxu0 0.0
    %495 = vmatpush1.msra.mxu0 %v103
    %496 = vmatprep.subr.mxu0 0.0
    %497 = vmatpush1.msra.mxu0 %v104
    %498 = vmatprep.subr.mxu0 0.0
    %499 = vmatpush1.msra.mxu0 %v105
    %500 = vmatprep.subr.mxu0 0.0
    %501 = vmatpush1.msra.mxu0 %v106
    %502 = vmatprep.subr.mxu0 0.0
    %503 = vmatpush1.msra.mxu0 %v107
    %504 = vmatprep.subr.mxu0 0.0
    %505 = vmatpush1.msra.mxu0 %v108
    %506 = vmatprep.subr.mxu0 0.0
    %507 = vmatpush1.msra.mxu0 %v109
    %508 = vmatprep.subr.mxu0 0.0
    %509 = vmatpush1.msra.mxu0 %v110
    %510 = vmatprep.subr.mxu0 0.0
    %511 = vmatpush1.msra.mxu0 %v111
    %512 = vmatprep.subr.mxu0 0.0
    %513 = vmatpush1.msra.mxu0 %v112
    %514 = vmatprep.subr.mxu0 0.0
    %515 = vmatpush1.msra.mxu0 %v113
    %516 = vmatprep.subr.mxu0 0.0
    %517 = vmatpush1.msra.mxu0 0.0
    %518 = vmatprep.subr.mxu0 0.0
    %519 = vmatpush1.msra.mxu0 0.0
    %520 = vmatprep.subr.mxu0 0.0
    %521 = vmatpush1.msra.mxu0 0.0
    %522 = vmatprep.subr.mxu0 0.0
    %523 = vmatpush1.msra.mxu0 0.0
    %524 = vmatprep.subr.mxu0 0.0
    %525 = vmatpush1.msra.mxu0 0.0
    %526 = vmatprep.subr.mxu0 0.0
    %527 = vmatpush1.msra.mxu0 0.0
    %528 = vmatprep.subr.mxu0 0.0
    %529 = vmatpush1.msra.mxu0 0.0
    %530 = vmatprep.subr.mxu0 0.0
    %531 = vmatpush1.msra.mxu0 0.0
    %532 = vmatprep.subr.mxu0 0.0
    %533 = vmatpush1.msra.mxu0 0.0
    %534 = vmatprep.subr.mxu0 0.0
    %535 = vmatpush1.msra.mxu0 0.0
    %536 = vmatprep.subr.mxu0 0.0
    %537 = vmatpush1.msra.mxu0 0.0
    %538 = vmatprep.subr.mxu0 0.0
    %539 = vmatpush1.msra.mxu0 0.0
    %540 = vmatprep.subr.mxu0 0.0
    %541 = vmatpush1.msra.mxu0 0.0
    %542 = vmatprep.subr.mxu0 0.0
    %543 = vmatpush1.msra.mxu0 0.0
    %544 = vmatprep.subr.mxu0 0.0
    %545 = vmatpush1.msra.mxu0 0.0
    %546 = vmatprep.subr.mxu0 0.0
    %547 = vmatpush1.msra.mxu0 0.0
    %548 = vmatprep.subr.mxu0 0.0
    %549 = vmatpush1.msra.mxu0 0.0
    %550 = vmatprep.subr.mxu0 0.0
    %551 = vmatpush1.msra.mxu0 0.0
    %552 = vmatprep.subr.mxu0 0.0
    %553 = vmatpush1.msra.mxu0 0.0
    %554 = vmatprep.subr.mxu0 0.0
    %555 = vmatpush1.msra.mxu0 0.0
    %556 = vmatprep.mubr.f32.mxu0 0.0
    %557 = vmatmul.mubr.f32.gmra.mrb[0].mxu0 %v140
    %v558 = vpop.f32.mrb[0].mxu0
    %v559 = vadd.f32 0.0, %v558
    %v560 = vpop.f32.mrb[0].mxu0
    %561 = vdwg.mxu0
    %562 = vmatprep.subr.mxu0 0.0
    %563 = vmatpush1.msra.mxu0 %v114
    %564 = vmatprep.subr.mxu0 0.0
    %565 = vmatpush1.msra.mxu0 %v115
    %566 = vmatprep.subr.mxu0 0.0
    %567 = vmatpush1.msra.mxu0 %v116
    %568 = vmatprep.subr.mxu0 0.0
    %569 = vmatpush1.msra.mxu0 %v117
    %570 = vmatprep.subr.mxu0 0.0
    %571 = vmatpush1.msra.mxu0 %v118
    %572 = vmatprep.subr.mxu0 0.0
    %573 = vmatpush1.msra.mxu0 %v119
    %574 = vmatprep.subr.mxu0 0.0
    %575 = vmatpush1.msra.mxu0 %v120
    %576 = vmatprep.subr.mxu0 0.0
    %577 = vmatpush1.msra.mxu0 %v121
    %578 = vmatprep.subr.mxu0 0.0
    %579 = vmatpush1.msra.mxu0 %v122
    %580 = vmatprep.subr.mxu0 0.0
    %581 = vmatpush1.msra.mxu0 %v123
    %582 = vmatprep.subr.mxu0 0.0
    %583 = vmatpush1.msra.mxu0 %v124
    %584 = vmatprep.subr.mxu0 0.0
    %585 = vmatpush1.msra.mxu0 %v125
    %586 = vmatprep.subr.mxu0 0.0
    %587 = vmatpush1.msra.mxu0 0.0
    %588 = vmatprep.subr.mxu0 0.0
    %589 = vmatpush1.msra.mxu0 0.0
    %590 = vmatprep.subr.mxu0 0.0
    %591 = vmatpush1.msra.mxu0 0.0
    %592 = vmatprep.subr.mxu0 0.0
    %593 = vmatpush1.msra.mxu0 0.0
    %594 = vmatprep.subr.mxu0 0.0
    %595 = vmatpush1.msra.mxu0 0.0
    %596 = vmatprep.subr.mxu0 0.0
    %597 = vmatpush1.msra.mxu0 0.0
    %598 = vmatprep.subr.mxu0 0.0
    %599 = vmatpush1.msra.mxu0 0.0
    %600 = vmatprep.subr.mxu0 0.0
    %601 = vmatpush1.msra.mxu0 0.0
    %602 = vmatprep.subr.mxu0 0.0
    %603 = vmatpush1.msra.mxu0 0.0
    %604 = vmatprep.subr.mxu0 0.0
    %605 = vmatpush1.msra.mxu0 0.0
    %606 = vmatprep.subr.mxu0 0.0
    %607 = vmatpush1.msra.mxu0 0.0
    %608 = vmatprep.subr.mxu0 0.0
    %609 = vmatpush1.msra.mxu0 0.0
    %610 = vmatprep.subr.mxu0 0.0
    %611 = vmatpush1.msra.mxu0 0.0
    %612 = vmatprep.subr.mxu0 0.0
    %613 = vmatpush1.msra.mxu0 0.0
    %614 = vmatprep.subr.mxu0 0.0
    %615 = vmatpush1.msra.mxu0 0.0
    %616 = vmatprep.subr.mxu0 0.0
    %617 = vmatpush1.msra.mxu0 0.0
    %618 = vmatprep.subr.mxu0 0.0
    %619 = vmatpush1.msra.mxu0 0.0
    %620 = vmatprep.subr.mxu0 0.0
    %621 = vmatpush1.msra.mxu0 0.0
    %622 = vmatprep.subr.mxu0 0.0
    %623 = vmatpush1.msra.mxu0 0.0
    %624 = vmatprep.subr.mxu0 0.0
    %625 = vmatpush1.msra.mxu0 0.0
    %626 = vmatprep.mubr.f32.mxu0 0.0
    %627 = vmatmul.mubr.f32.gmra.mrb[0].mxu0 %v140
    %v628 = vpop.f32.mrb[0].mxu0
    %v629 = vadd.f32 0.0, %v628
    %v630 = vpop.f32.mrb[0].mxu0
    %631 = vdwg.mxu0
    %632 = vmatprep.subr.mxu0 0.0
    %633 = vmatpush1.msra.mxu0 %v126
    %634 = vmatprep.subr.mxu0 0.0
    %635 = vmatpush1.msra.mxu0 %v127
    %636 = vmatprep.subr.mxu0 0.0
    %637 = vmatpush1.msra.mxu0 %v128
    %638 = vmatprep.subr.mxu0 0.0
    %639 = vmatpush1.msra.mxu0 %v129
    %640 = vmatprep.subr.mxu0 0.0
    %641 = vmatpush1.msra.mxu0 %v130
    %642 = vmatprep.subr.mxu0 0.0
    %643 = vmatpush1.msra.mxu0 %v131
    %644 = vmatprep.subr.mxu0 0.0
    %645 = vmatpush1.msra.mxu0 %v132
    %646 = vmatprep.subr.mxu0 0.0
    %647 = vmatpush1.msra.mxu0 %v133
    %648 = vmatprep.subr.mxu0 0.0
    %649 = vmatpush1.msra.mxu0 %v134
    %650 = vmatprep.subr.mxu0 0.0
    %651 = vmatpush1.msra.mxu0 %v135
    %652 = vmatprep.subr.mxu0 0.0
    %653 = vmatpush1.msra.mxu0 %v136
    %654 = vmatprep.subr.mxu0 0.0
    %655 = vmatpush1.msra.mxu0 %v137
    %656 = vmatprep.subr.mxu0 0.0
    %657 = vmatpush1.msra.mxu0 0.0
    %658 = vmatprep.subr.mxu0 0.0
    %659 = vmatpush1.msra.mxu0 0.0
    %660 = vmatprep.subr.mxu0 0.0
    %661 = vmatpush1.msra.mxu0 0.0
    %662 = vmatprep.subr.mxu0 0.0
    %663 = vmatpush1.msra.mxu0 0.0
    %664 = vmatprep.subr.mxu0 0.0
    %665 = vmatpush1.msra.mxu0 0.0
    %666 = vmatprep.subr.mxu0 0.0
    %667 = vmatpush1.msra.mxu0 0.0
    %668 = vmatprep.subr.mxu0 0.0
    %669 = vmatpush1.msra.mxu0 0.0
    %670 = vmatprep.subr.mxu0 0.0
    %671 = vmatpush1.msra.mxu0 0.0
    %672 = vmatprep.subr.mxu0 0.0
    %673 = vmatpush1.msra.mxu0 0.0
    %674 = vmatprep.subr.mxu0 0.0
    %675 = vmatpush1.msra.mxu0 0.0
    %676 = vmatprep.subr.mxu0 0.0
    %677 = vmatpush1.msra.mxu0 0.0
    %678 = vmatprep.subr.mxu0 0.0
    %679 = vmatpush1.msra.mxu0 0.0
    %680 = vmatprep.subr.mxu0 0.0
    %681 = vmatpush1.msra.mxu0 0.0
    %682 = vmatprep.subr.mxu0 0.0
    %683 = vmatpush1.msra.mxu0 0.0
    %684 = vmatprep.subr.mxu0 0.0
    %685 = vmatpush1.msra.mxu0 0.0
    %686 = vmatprep.subr.mxu0 0.0
    %687 = vmatpush1.msra.mxu0 0.0
    %688 = vmatprep.subr.mxu0 0.0
    %689 = vmatpush1.msra.mxu0 0.0
    %690 = vmatprep.subr.mxu0 0.0
    %691 = vmatpush1.msra.mxu0 0.0
    %692 = vmatprep.subr.mxu0 0.0
    %693 = vmatpush1.msra.mxu0 0.0
    %694 = vmatprep.subr.mxu0 0.0
    %695 = vmatpush1.msra.mxu0 0.0
    %696 = vmatprep.mubr.f32.mxu0 0.0
    %697 = vmatmul.mubr.f32.gmra.mrb[0].mxu0 %v140
    %v698 = vpop.f32.mrb[0].mxu0
    %v699 = vadd.f32 0.0, %v698
    %v700 = vpop.f32.mrb[0].mxu0
    %701 = vdwg.mxu0
    %v702 = vld [vmem:[#allocation5] sm:$0xff]
    %v704 = vcombine.high %v702, %v702
    %v706 = vunpack.c.l.s4 1966171168
    %v707 = vunpack.c.0.s8 %v706
    %v708 = vlaneseq
    %v709 = vshrl.u32 %v708, 7
    %v710 = vsub.s32 %v707, %v709
    %v711 = vrot.slane %v702, %v710
    %v713 = vunpack.c.l.s4 1966171168
    %v714 = vunpack.c.0.s8 %v713
    %v715 = vlaneseq
    %v716 = vshrl.u32 %v715, 7
    %v717 = vsub.s32 %v714, %v716
    %v718 = vrot.slane %v704, %v717
    %v719 = vcombine.high %v711, %v711
    %v720 = vcombine.high %v718, %v718
    %v722 = vunpack.c.l.s4 1966171168
    %v723 = vunpack.c.0.s8 %v722
    %v724 = vlaneseq
    %v725 = vshrl.u32 %v724, 7
    %v726 = vsub.s32 %v723, %v725
    %v727 = vrot.slane %v711, %v726
    %v729 = vunpack.c.l.s4 1966171168
    %v730 = vunpack.c.0.s8 %v729
    %v731 = vlaneseq
    %v732 = vshrl.u32 %v731, 7
    %v733 = vsub.s32 %v730, %v732
    %v734 = vrot.slane %v718, %v733
    %v736 = vunpack.c.l.s4 1966171168
    %v737 = vunpack.c.0.s8 %v736
    %v738 = vlaneseq
    %v739 = vshrl.u32 %v738, 7
    %v740 = vsub.s32 %v737, %v739
    %v741 = vrot.slane %v719, %v740
    %v743 = vunpack.c.l.s4 1966171168
    %v744 = vunpack.c.0.s8 %v743
    %v745 = vlaneseq
    %v746 = vshrl.u32 %v745, 7
    %v747 = vsub.s32 %v744, %v746
    %v748 = vrot.slane %v720, %v747
    %v749 = vcombine.high %v727, %v727
    %v750 = vcombine.high %v734, %v734
    %v751 = vcombine.high %v741, %v741
    %v752 = vcombine.high %v748, %v748
    %vm761 = vcmp.gt.f32.partialorder %v727, 0.0
    %vm762 = vcmp.gt.f32.partialorder %v741, 0.0
    %vm763 = vcmp.gt.f32.partialorder %v749, 0.0
    %vm764 = vcmp.gt.f32.partialorder %v751, 0.0
    %vm765 = vcmp.gt.f32.partialorder %v734, 0.0
    %vm766 = vcmp.gt.f32.partialorder %v748, 0.0
    %vm767 = vcmp.gt.f32.partialorder %v750, 0.0
    %vm768 = vcmp.gt.f32.partialorder %v752, 0.0
    %v769 = vsel %vm761, 1, 0
    %v770 = vsel %vm762, 1, 0
    %v771 = vsel %vm763, 1, 0
    %v772 = vsel %vm764, 1, 0
    %v773 = vsel %vm765, 1, 0
    %v774 = vsel %vm766, 1, 0
    %v775 = vsel %vm767, 1, 0
    %v776 = vsel %vm768, 1, 0
    %v777 = vlaneseq
    %v778 = vshrl.u32 %v777, 7
    %v779 = vsub.s32 0, %v778
    %v780 = vrot.slane %v769, %v779
    %v781 = vlaneseq
    %v782 = vshrl.u32 %v781, 7
    %v783 = vsub.s32 0, %v782
    %v784 = vrot.slane %v770, %v783
    %v785 = vlaneseq
    %v786 = vshrl.u32 %v785, 7
    %v787 = vsub.s32 0, %v786
    %v788 = vrot.slane %v771, %v787
    %v789 = vlaneseq
    %v790 = vshrl.u32 %v789, 7
    %v791 = vsub.s32 0, %v790
    %v792 = vrot.slane %v772, %v791
    %v793 = vlaneseq
    %v794 = vshrl.u32 %v793, 7
    %v795 = vsub.s32 0, %v794
    %v796 = vrot.slane %v773, %v795
    %v797 = vlaneseq
    %v798 = vshrl.u32 %v797, 7
    %v799 = vsub.s32 0, %v798
    %v800 = vrot.slane %v774, %v799
    %v801 = vlaneseq
    %v802 = vshrl.u32 %v801, 7
    %v803 = vsub.s32 0, %v802
    %v804 = vrot.slane %v775, %v803
    %v805 = vlaneseq
    %v806 = vshrl.u32 %v805, 7
    %v807 = vsub.s32 0, %v806
    %v808 = vrot.slane %v776, %v807
    %vm809 = vcmp.eq.s32.totalorder %v780, 1
    %vm810 = vcmp.eq.s32.totalorder %v784, 1
    %vm811 = vcmp.eq.s32.totalorder %v788, 1
    %vm812 = vcmp.eq.s32.totalorder %v792, 1
    %vm813 = vcmp.eq.s32.totalorder %v796, 1
    %vm814 = vcmp.eq.s32.totalorder %v800, 1
    %vm815 = vcmp.eq.s32.totalorder %v804, 1
    %vm816 = vcmp.eq.s32.totalorder %v808, 1
    %v817 = vsel %vm809, %v209, -1e+30
    %v818 = vsel %vm810, %v279, -1e+30
    %v819 = vsel %vm811, %v349, -1e+30
    %v820 = vsel %vm812, %v419, -1e+30
    %v821 = vsel %vm813, %v489, -1e+30
    %v822 = vsel %vm814, %v559, -1e+30
    %v823 = vsel %vm815, %v629, -1e+30
    %v824 = vsel %vm816, %v699, -1e+30
    %vm825 = vcmask 1041408
    %v826 = vsel %vm825, %v817, -inf
    %827 = vmax.xlane.f32.xlu0 %v826
    %v828 = vpop.xlane.xlu0 %827
    %v829 = vsel %vm825, %v818, -inf
    %830 = vmax.xlane.f32.xlu0 %v829
    %v831 = vpop.xlane.xlu0 %830
    %v832 = vsel %vm825, %v819, -inf
    %833 = vmax.xlane.f32.xlu0 %v832
    %v834 = vpop.xlane.xlu0 %833
    %v835 = vsel %vm825, %v820, -inf
    %836 = vmax.xlane.f32.xlu0 %v835
    %v837 = vpop.xlane.xlu0 %836
    %v838 = vsel %vm825, %v821, -inf
    %839 = vmax.xlane.f32.xlu0 %v838
    %v840 = vpop.xlane.xlu0 %839
    %v841 = vsel %vm825, %v822, -inf
    %842 = vmax.xlane.f32.xlu0 %v841
    %v843 = vpop.xlane.xlu0 %842
    %v844 = vsel %vm825, %v823, -inf
    %845 = vmax.xlane.f32.xlu0 %v844
    %v846 = vpop.xlane.xlu0 %845
    %v847 = vsel %vm825, %v824, -inf
    %848 = vmax.xlane.f32.xlu0 %v847
    %v849 = vpop.xlane.xlu0 %848
    %v850 = vsub.f32 %v817, %v828
    %v851 = vsub.f32 %v818, %v831
    %v852 = vsub.f32 %v819, %v834
    %v853 = vsub.f32 %v820, %v837
    %v854 = vsub.f32 %v821, %v840
    %v855 = vsub.f32 %v822, %v843
    %v856 = vsub.f32 %v823, %v846
    %v857 = vsub.f32 %v824, %v849
    %v858 = vmul.f32 %v850, 1.442695
    %v859 = vpow.pop %v858
    %v860 = vmul.f32 %v851, 1.442695
    %v861 = vpow.pop %v860
    %v862 = vmul.f32 %v852, 1.442695
    %v863 = vpow.pop %v862
    %v864 = vmul.f32 %v853, 1.442695
    %v865 = vpow.pop %v864
    %v866 = vmul.f32 %v854, 1.442695
    %v867 = vpow.pop %v866
    %v868 = vmul.f32 %v855, 1.442695
    %v869 = vpow.pop %v868
    %v870 = vmul.f32 %v856, 1.442695
    %v871 = vpow.pop %v870
    %v872 = vmul.f32 %v857, 1.442695
    %v873 = vpow.pop %v872
    %v874 = vsel %vm825, %v859, 0.0
    %875 = vadd.xlane.f32.xlu0 %v874
    %v876 = vpop.xlane.xlu0 %875
    %v877 = vsel %vm825, %v861, 0.0
    %878 = vadd.xlane.f32.xlu0 %v877
    %v879 = vpop.xlane.xlu0 %878
    %v880 = vsel %vm825, %v863, 0.0
    %881 = vadd.xlane.f32.xlu0 %v880
    %v882 = vpop.xlane.xlu0 %881
    %v883 = vsel %vm825, %v865, 0.0
    %884 = vadd.xlane.f32.xlu0 %v883
    %v885 = vpop.xlane.xlu0 %884
    %v886 = vsel %vm825, %v867, 0.0
    %887 = vadd.xlane.f32.xlu0 %v886
    %v888 = vpop.xlane.xlu0 %887
    %v889 = vsel %vm825, %v869, 0.0
    %890 = vadd.xlane.f32.xlu0 %v889
    %v891 = vpop.xlane.xlu0 %890
    %v892 = vsel %vm825, %v871, 0.0
    %893 = vadd.xlane.f32.xlu0 %v892
    %v894 = vpop.xlane.xlu0 %893
    %v895 = vsel %vm825, %v873, 0.0
    %896 = vadd.xlane.f32.xlu0 %v895
    %v897 = vpop.xlane.xlu0 %896
    %v898 = vlog2.pop %v876
    %v899 = vmul.f32 %v898, 0.6931472
    %v900 = vlog2.pop %v879
    %v901 = vmul.f32 %v900, 0.6931472
    %v902 = vlog2.pop %v882
    %v903 = vmul.f32 %v902, 0.6931472
    %v904 = vlog2.pop %v885
    %v905 = vmul.f32 %v904, 0.6931472
    %v906 = vlog2.pop %v888
    %v907 = vmul.f32 %v906, 0.6931472
    %v908 = vlog2.pop %v891
    %v909 = vmul.f32 %v908, 0.6931472
    %v910 = vlog2.pop %v894
    %v911 = vmul.f32 %v910, 0.6931472
    %v912 = vlog2.pop %v897
    %v913 = vmul.f32 %v912, 0.6931472
    %v914 = vsub.f32 %v850, %v899
    %v915 = vsub.f32 %v851, %v901
    %v916 = vsub.f32 %v852, %v903
    %v917 = vsub.f32 %v853, %v905
    %v918 = vsub.f32 %v854, %v907
    %v919 = vsub.f32 %v855, %v909
    %v920 = vsub.f32 %v856, %v911
    %v921 = vsub.f32 %v857, %v913
    %922 = vst [vmem:[#allocation7] sm:$0x3] %v914
    %923 = vst [vmem:[#allocation7 + $0x2] sm:$0x3] %v915
    %924 = vst [vmem:[#allocation7 + $0x4] sm:$0x3] %v916
    %925 = vst [vmem:[#allocation7 + $0x6] sm:$0x3] %v917
    %926 = vst [vmem:[#allocation7 + $0x8] sm:$0x3] %v918
    %927 = vst [vmem:[#allocation7 + $0xa] sm:$0x3] %v919
    %928 = vst [vmem:[#allocation7 + $0xc] sm:$0x3] %v920
    %929 = vst [vmem:[#allocation7 + $0xe] sm:$0x3] %v921
    // Predicated region
    $region22: #{tpu_custom_call.1} parent=1 // pred_check
      _
    $region23: #{tpu_custom_call.1} parent=1 // pred_check_branch
      %931 = sbr.rel (0) target = $region25
    $region24: #{tpu_custom_call.1} parent=1 // pred_region
      %s933 = ssub.s32 256, 256
      %934 = vsyncadd [#allocation4], %s933
      %s935 = sshll.u32 [#allocation7], 4
      %s936 = int_to_ptr.vmem [resolvable:$true] %s935
      %941 = dma.vmem_to_hbm [thread:$0]  %s936, 256, %s3, [#allocation4], 32, 32, 2
    $region25: #{tpu_custom_call.1} parent=1 // pred_fallthru
      _
    // Predicated region
    $region26: #{tpu_custom_call.1} parent=1 // pred_check
      _
    $region27: #{tpu_custom_call.1} parent=1 // pred_check_branch
      %943 = sbr.rel (0) target = $region29
    $region28: #{tpu_custom_call.1} parent=1 // pred_region
      %944 = dma.done [#allocation4], 256
    $region29: #{tpu_custom_call.1} parent=1 // pred_fallthru
      _
    %945 = vsyncpa [#allocation3], 1
    %946 = vsyncpa [#allocation6], 1
    %947 = vsyncpa [#allocation4], 1

</llo_original>
